<compile_context>
chip_gen: v7x
topology: tpu7x:2x2x1
jax: 0.10.0
libtpu: 0.0.40
codegen_flags: <defaults>
</compile_context>

<pallas_src>
import functools
import math

import jax
import jax.numpy as jnp
from jax.experimental import pallas as pl
from jax.experimental.pallas import tpu as pltpu


def _round_up(x, m):
    return ((x + m - 1) // m) * m


def _vmem_capacity_bytes():
    """Per-TensorCore VMEM capacity; conservative fallback (v7x = 64 MiB)."""
    try:
        cap = getattr(pltpu.get_tpu_info(), "vmem_capacity_bytes", None)
        if cap:
            return int(cap)
    except Exception:
        pass
    return 64 << 20


# ---------------------------------------------------------------------------
# Kernel 1:  support = x @ W   (hoisted out of the adj reduction; emits the
#            compute dtype directly so the main kernel streams fewer bytes)
# ---------------------------------------------------------------------------
def _support_kernel(x_ref, w_ref, o_ref):
    o_ref[...] = jnp.dot(
        x_ref[...], w_ref[...], preferred_element_type=jnp.float32
    ).astype(o_ref.dtype)


# ---------------------------------------------------------------------------
# Kernel 2:  out = adj @ support (+ bias), tiled (row, k); f32 output block is
#            resident across k and accumulated into directly (no scratch).
# ---------------------------------------------------------------------------
def _adj_matmul_kernel(adj_ref, s_ref, b_ref, o_ref, *, tk, resident_support):
    k = pl.program_id(1)

    @pl.when(k == 0)
    def _():
        o_ref[...] = jnp.zeros_like(o_ref)

    if resident_support:
        # Whole support matrix lives in VMEM; slice the k-th row chunk.
        row0 = pl.multiple_of(k * tk, 128)
        s = s_ref[pl.ds(row0, tk), :]
    else:
        s = s_ref[...]

    o_ref[...] += jnp.dot(adj_ref[...], s, preferred_element_type=jnp.float32)

    @pl.when(k == pl.num_programs(1) - 1)
    def _():
        # Bias added exactly once, in the finalize branch.
        o_ref[...] += b_ref[...]


# ---------------------------------------------------------------------------
# Wrapper
# ---------------------------------------------------------------------------
def graph_convolution(x, adj, weight, bias=None, *, tile_m=1024, tile_k=1024,
                      adj_dtype=jnp.bfloat16):
    """GCN layer forward:  adj @ (x @ weight) (+ bias).

    adj_dtype: dtype used to stream the adjacency and the support matrix
    (default bf16: ~2x HBM traffic reduction, f32 accumulation).  Pass None
    for full f32.  For multi-layer / training reuse, pre-cast (and pre-pad)
    adj outside this function so the cast pass over N^2 happens once.
    """
    n, f_in = x.shape
    f_in_w, f_out = weight.shape
    assert f_in == f_in_w
    assert adj.shape == (n, n)

    compute_dtype = (jnp.dtype(adj_dtype) if adj_dtype is not None
                     else jnp.dtype(jnp.float32))

    # Lane-dense output feature axis (128-aligned; 256 once large enough to
    # matter for the 256-wide v6e/v7x MXU in a compute-bound regime).
    f_out_p = _round_up(f_out, 256 if f_out > 1024 else 128)

    n_r = _round_up(n, 128)
    tm = _round_up(min(tile_m, n_r), 128)
    tk = _round_up(min(tile_k, n_r), 128)
    # Keep >= 2 row tiles on mid/large graphs so ("parallel", ...) can split
    # output rows across two TensorCores (v7x megacore).
    if tm >= n_r and n_r >= 256:
        tm = _round_up(n_r // 2, 128)

    adj_bytes = compute_dtype.itemsize
    sup_bytes = compute_dtype.itemsize
    vmem_cap = _vmem_capacity_bytes()
    budget = int(0.8 * vmem_cap)

    def _footprint(tm_, tk_, resident_):
        n_pc = _round_up(n, tk_)
        sup = (2 * n_pc * f_out_p * sup_bytes if resident_
               else 2 * tk_ * f_out_p * sup_bytes)
        return (2 * tm_ * tk_ * adj_bytes       # double-buffered adj tiles
                + sup                           # support (resident / streamed)
                + 2 * tm_ * f_out_p * 4         # double-buffered f32 out block
                + 2 * f_out_p * 4)              # bias row

    # Keep support fully VMEM-resident when it is small enough.
    resident = (_round_up(n, tk) * f_out_p * sup_bytes <= (12 << 20)
                and _footprint(tm, tk, True) <= budget)

    # Shrink tiles until the footprint fits the VMEM budget (v7x = 64 MiB).
    while _footprint(tm, tk, resident) > budget and tm > 128:
        tm = max(128, (tm // 2) // 128 * 128)
    while _footprint(tm, tk, resident) > budget and tk > 128:
        tk = max(128, (tk // 2) // 128 * 128)
        resident = resident and (
            _round_up(n, tk) * f_out_p * sup_bytes <= (12 << 20))

    n_pad_r = _round_up(n, tm)   # adj rows / output rows
    n_pad_c = _round_up(n, tk)   # adj cols / support rows

    # ---- pad / cast only when needed ---------------------------------------
    x_p = x if n_pad_c == n else jnp.pad(x, ((0, n_pad_c - n), (0, 0)))
    w_p = (weight if f_out_p == f_out
           else jnp.pad(weight, ((0, 0), (0, f_out_p - f_out))))

    adj_p = adj
    if adj_p.dtype != compute_dtype:
        adj_p = adj_p.astype(compute_dtype)
    if n_pad_r != n or n_pad_c != n:
        adj_p = jnp.pad(adj_p, ((0, n_pad_r - n), (0, n_pad_c - n)))

    if bias is not None:
        b_p = bias.astype(jnp.float32)
        if f_out_p != f_out:
            b_p = jnp.pad(b_p, (0, f_out_p - f_out))
        b_p = b_p.reshape(1, f_out_p)
    else:
        b_p = jnp.zeros((1, f_out_p), jnp.float32)

    # ---- support = x @ W (small, row-tiled, emits compute dtype) -----------
    ts = tk  # divides n_pad_c by construction
    sup_vmem = 2 * (ts * f_in * x_p.dtype.itemsize
                    + f_in * f_out_p * w_p.dtype.itemsize
                    + ts * f_out_p * sup_bytes)
    support = pl.pallas_call(
        _support_kernel,
        out_shape=jax.ShapeDtypeStruct((n_pad_c, f_out_p), compute_dtype),
        grid_spec=pltpu.PrefetchScalarGridSpec(
            num_scalar_prefetch=0,
            grid=(n_pad_c // ts,),
            in_specs=[
                pl.BlockSpec((ts, f_in), lambda i: (i, 0)),
                pl.BlockSpec((f_in, f_out_p), lambda i: (0, 0)),
            ],
            out_specs=pl.BlockSpec((ts, f_out_p), lambda i: (i, 0)),
        ),
        compiler_params=pltpu.CompilerParams(
            dimension_semantics=("parallel",),
            vmem_limit_bytes=int(min(max(2 * sup_vmem, 32 << 20),
                                     int(0.85 * vmem_cap)))),
        cost_estimate=pl.CostEstimate(
            flops=2 * n_pad_c * f_in * f_out_p,
            transcendentals=0,
            bytes_accessed=(x_p.dtype.itemsize * n_pad_c * f_in
                            + w_p.dtype.itemsize * f_in * f_out_p
                            + sup_bytes * n_pad_c * f_out_p)),
    )(x_p, w_p)

    # ---- out = adj @ support (+ bias) ---------------------------------------
    grid_m = n_pad_r // tm
    grid_k = n_pad_c // tk

    if resident:
        # Constant block index: Pallas fetches support once and keeps it in
        # VMEM across the whole grid (no re-streaming per row tile).
        s_spec = pl.BlockSpec((n_pad_c, f_out_p), lambda i, k: (0, 0))
    else:
        s_spec = pl.BlockSpec((tk, f_out_p), lambda i, k: (k, 0))

    vmem_bytes = _footprint(tm, tk, resident)
    vmem_limit = int(min(max(2 * vmem_bytes, 32 << 20), int(0.85 * vmem_cap)))

    kernel = functools.partial(_adj_matmul_kernel, tk=tk,
                               resident_support=resident)

    out_p = pl.pallas_call(
        kernel,
        out_shape=jax.ShapeDtypeStruct((n_pad_r, f_out_p), jnp.float32),
        grid_spec=pltpu.PrefetchScalarGridSpec(
            num_scalar_prefetch=0,
            grid=(grid_m, grid_k),
            in_specs=[
                pl.BlockSpec((tm, tk), lambda i, k: (i, k)),
                s_spec,
                pl.BlockSpec((1, f_out_p), lambda i, k: (0, 0)),
            ],
            out_specs=pl.BlockSpec((tm, f_out_p), lambda i, k: (i, 0)),
        ),
        compiler_params=pltpu.CompilerParams(
            dimension_semantics=("parallel", "arbitrary"),
            vmem_limit_bytes=vmem_limit),
        cost_estimate=pl.CostEstimate(
            flops=2 * n_pad_r * n_pad_c * f_out_p,
            transcendentals=0,
            bytes_accessed=(adj_bytes * n_pad_r * n_pad_c
                            + sup_bytes * n_pad_c * f_out_p
                            * (1 if resident else grid_m)
                            + 4 * n_pad_r * f_out_p)),
    )(adj_p, support, b_p)

    return out_p[:n, :f_out]


def init_gcn_params(key, in_features, out_features, with_bias=True):
    """Mirrors reset_parameters: U(-stdv, stdv), stdv = 1/sqrt(out_features)."""
    stdv = 1.0 / math.sqrt(out_features)
    kw, kb = jax.random.split(key)
    weight = jax.random.uniform(
        kw, (in_features, out_features), jnp.float32, minval=-stdv, maxval=stdv
    )
    bias = None
    if with_bias:
        bias = jax.random.uniform(
            kb, (out_features,), jnp.float32, minval=-stdv, maxval=stdv
        )
    return weight, bias


if __name__ == "__main__":
    key = jax.random.PRNGKey(0)
    k_x, k_adj, k_p = jax.random.split(key, 3)

    N = 64          # number of graph nodes
    F_IN = 32       # in_features
    F_OUT = 32      # out_features

    # Node features.
    x = jax.random.normal(k_x, (N, F_IN), jnp.float32)

    # Symmetric-normalized random adjacency (dense representation).
    a = (jax.random.uniform(k_adj, (N, N)) < 0.1).astype(jnp.float32)
    a = jnp.maximum(a, a.T) + jnp.eye(N, dtype=jnp.float32)  # add self-loops
    deg = jnp.sum(a, axis=1)
    d_inv_sqrt = 1.0 / jnp.sqrt(deg)
    adj = a * d_inv_sqrt[:, None] * d_inv_sqrt[None, :]

    weight, bias = init_gcn_params(k_p, F_IN, F_OUT, with_bias=True)

    ref = adj @ (x @ weight) + bias[None, :]
    ref_nb = adj @ (x @ weight)

    # Default path: bf16 adjacency / support stream, f32 accumulation.
    out = jax.block_until_ready(graph_convolution(x, adj, weight, bias))
    assert out.shape == (N, F_OUT)
    assert jnp.allclose(out, ref, atol=2e-2, rtol=2e-2), \
        float(jnp.max(jnp.abs(out - ref)))

    # Full-precision path (adj_dtype=None) matches the reference tightly.
    out_f32 = jax.block_until_ready(
        graph_convolution(x, adj, weight, bias, adj_dtype=None))
    assert jnp.allclose(out_f32, ref, atol=1e-5, rtol=1e-5)

    # Without bias.
    out_nb = jax.block_until_ready(
        graph_convolution(x, adj, weight, None, adj_dtype=None))
    assert jnp.allclose(out_nb, ref_nb, atol=1e-5, rtol=1e-5)

    print("KERNEL_OK")
</pallas_src>

<mosaic_0001>
module attributes {stable_mosaic.version = 11 : i64} {
  func.func @_support_kernel(%arg0: i32, %arg1: memref<128x32xf32, #tpu.memory_space<vmem>>, %arg2: memref<32x128xf32, #tpu.memory_space<vmem>>, %arg3: memref<128x128xbf16, #tpu.memory_space<vmem>>) attributes {dimension_semantics = [#tpu.dimension_semantics<parallel>], iteration_bounds = array<i64: 1>, scalar_prefetch = 0 : i64, scratch_operands = 0 : i64, tpu.core_type = #tpu.core_type<tc>, window_params = [{transform_indices = @transform_0, window_bounds = array<i64: 128, 32>}, {pipeline_mode = #tpu.pipeline_mode<synchronous>, transform_indices = @transform_1, window_bounds = array<i64: 32, 128>}, {transform_indices = @transform_2, window_bounds = array<i64: 128, 128>}]} {
    %c0 = arith.constant 0 : index
    %c0_0 = arith.constant 0 : index
    %0 = vector.load %arg1[%c0, %c0_0] : memref<128x32xf32, #tpu.memory_space<vmem>>, vector<128x32xf32>
    %c0_1 = arith.constant 0 : index
    %c0_2 = arith.constant 0 : index
    %1 = vector.load %arg2[%c0_1, %c0_2] : memref<32x128xf32, #tpu.memory_space<vmem>>, vector<32x128xf32>
    %cst = arith.constant dense<0.000000e+00> : vector<128x128xf32>
    %2 = tpu.matmul %0, %1, %cst {dimension_numbers = #tpu.dot_dimension_numbers<[1], [0], [0], [1], [0, 0, 1, 1], [], []>} : vector<128x32xf32>, vector<32x128xf32>, vector<128x128xf32> -> vector<128x128xf32>
    %3 = arith.truncf %2 : vector<128x128xf32> to vector<128x128xbf16>
    %c0_3 = arith.constant 0 : index
    %c0_4 = arith.constant 0 : index
    %4 = vector.load %arg3[%c0_3, %c0_4] : memref<128x128xbf16, #tpu.memory_space<vmem>>, vector<128x128xbf16>
    tpu.vector_store %arg3[%c0_3, %c0_4], %3 {strides = array<i32>} : memref<128x128xbf16, #tpu.memory_space<vmem>>, vector<128x128xbf16>,
    return
  }
  func.func @transform_0(%arg0: i32) -> (i32, i32) {
    %c0_i32 = arith.constant 0 : i32
    %c0_i32_0 = arith.constant 0 : i32
    return %arg0, %c0_i32 : i32, i32
  }
  func.func @transform_1(%arg0: i32) -> (i32, i32) {
    %c0_i32 = arith.constant 0 : i32
    %c0_i32_0 = arith.constant 0 : i32
    %c0_i32_1 = arith.constant 0 : i32
    return %c0_i32, %c0_i32_0 : i32, i32
  }
  func.func @transform_2(%arg0: i32) -> (i32, i32) {
    %c0_i32 = arith.constant 0 : i32
    %c0_i32_0 = arith.constant 0 : i32
    return %arg0, %c0_i32 : i32, i32
  }
}

</mosaic_0001>

<llo_original>
// kernel: tpu_custom_call.1
$region0: #{tpu_custom_call.1}
  #allocation0 [shape = 'u32[]', space=smem, size = 0x4, offset = 0x4, fixed_abs, tag = 'smem constant byte address 0x4 - core index']
  #allocation1 [shape = 'u32[144,128]{1,0:T(1,128)}', space=vmem, size = 0x12000, scoped, tag = 'internal scratch']
  %s0 = inlined_call_operand.vmem [shape: f32[128,32], index: 0, kind: input, shape index: {}]
  %s1 = inlined_call_operand.vmem [shape: f32[32,128], index: 1, kind: input, shape index: {}]
  %s2 = inlined_call_operand.hbm [shape: bf16[128,128], index: 2, kind: output, shape index: {}]
  %s3 = sld [smem:[#allocation0]]
  $region18: #{tpu_custom_call.1} parent=0
    _
  %s5 = ssub.s32 1, %s3
  %s6 = scalar_select 0, %s5, %s3
  $region1: #{tpu_custom_call.1} parent=0
    #allocation2 [shape = 'u8[32768]{0}', space=vmem, size = 0x8000, scoped, tag = 'output window, operand 0, single buffered']
    #allocation3 [shape = 's32[1]{0}', space=sflag, size = 0x4, scoped, tag = 'scoped memory for tpu_custom_call.1']
    %7 = vsyncpa [#allocation3], 0
    // Predicated region
    $region2: #{tpu_custom_call.1} parent=1 // pred_check
      _
    $region3: #{tpu_custom_call.1} parent=1 // pred_check_branch
      %9 = sbr.rel (0) target = $region5
    $region4: #{tpu_custom_call.1} parent=1 // pred_region
      _
    $region5: #{tpu_custom_call.1} parent=1 // pred_fallthru
      _
    // Predicated region
    $region6: #{tpu_custom_call.1} parent=1 // pred_check
      _
    $region7: #{tpu_custom_call.1} parent=1 // pred_check_branch
      %11 = sbr.rel (0) target = $region9
    $region8: #{tpu_custom_call.1} parent=1 // pred_region
      _
    $region9: #{tpu_custom_call.1} parent=1 // pred_fallthru
      _
    %v12 = vld [vmem:[%s0] sm:$0xff]
    %v13 = vld [vmem:[%s0 + $0x8] sm:$0xff]
    %v14 = vld [vmem:[%s0 + $0x10] sm:$0xff]
    %v15 = vld [vmem:[%s0 + $0x18] sm:$0xff]
    %v16 = vld [vmem:[%s0 + $0x20] sm:$0xff]
    %v17 = vld [vmem:[%s0 + $0x28] sm:$0xff]
    %v18 = vld [vmem:[%s0 + $0x30] sm:$0xff]
    %v19 = vld [vmem:[%s0 + $0x38] sm:$0xff]
    %v20 = vld [vmem:[%s0 + $0x40] sm:$0xff]
    %v21 = vld [vmem:[%s0 + $0x48] sm:$0xff]
    %v22 = vld [vmem:[%s0 + $0x50] sm:$0xff]
    %v23 = vld [vmem:[%s0 + $0x58] sm:$0xff]
    %v24 = vld [vmem:[%s0 + $0x60] sm:$0xff]
    %v25 = vld [vmem:[%s0 + $0x68] sm:$0xff]
    %v26 = vld [vmem:[%s0 + $0x70] sm:$0xff]
    %v27 = vld [vmem:[%s0 + $0x78] sm:$0xff]
    %v28 = vld [vmem:[%s1] sm:$0xff]
    %v29 = vld [vmem:[%s1 + $0x8] sm:$0xff]
    %v30 = vld [vmem:[%s1 + $0x10] sm:$0xff]
    %v31 = vld [vmem:[%s1 + $0x18] sm:$0xff]
    %vm32 = vcmask 261120
    %v34 = vsel %vm32, %v12, 0
    %v37 = vsel %vm32, %v13, 0
    %v40 = vsel %vm32, %v14, 0
    %v43 = vsel %vm32, %v15, 0
    %v46 = vsel %vm32, %v16, 0
    %v49 = vsel %vm32, %v17, 0
    %v52 = vsel %vm32, %v18, 0
    %v55 = vsel %vm32, %v19, 0
    %v58 = vsel %vm32, %v20, 0
    %v61 = vsel %vm32, %v21, 0
    %v64 = vsel %vm32, %v22, 0
    %v67 = vsel %vm32, %v23, 0
    %v70 = vsel %vm32, %v24, 0
    %v73 = vsel %vm32, %v25, 0
    %v76 = vsel %vm32, %v26, 0
    %v79 = vsel %vm32, %v27, 0
    %81 = vmatprep.subr.mxu0 0.0
    %82 = vmatpush1.msra.mxu0 %v28
    %83 = vmatprep.subr.mxu0 0.0
    %84 = vmatpush1.msra.mxu0 %v29
    %85 = vmatprep.subr.mxu0 0.0
    %86 = vmatpush1.msra.mxu0 %v30
    %87 = vmatprep.subr.mxu0 0.0
    %88 = vmatpush1.msra.mxu0 %v31
    %89 = vmatprep.subr.mxu0 0.0
    %90 = vmatpush1.msra.mxu0 0.0
    %91 = vmatprep.subr.mxu0 0.0
    %92 = vmatpush1.msra.mxu0 0.0
    %93 = vmatprep.subr.mxu0 0.0
    %94 = vmatpush1.msra.mxu0 0.0
    %95 = vmatprep.subr.mxu0 0.0
    %96 = vmatpush1.msra.mxu0 0.0
    %97 = vmatprep.subr.mxu0 0.0
    %98 = vmatpush1.msra.mxu0 0.0
    %99 = vmatprep.subr.mxu0 0.0
    %100 = vmatpush1.msra.mxu0 0.0
    %101 = vmatprep.subr.mxu0 0.0
    %102 = vmatpush1.msra.mxu0 0.0
    %103 = vmatprep.subr.mxu0 0.0
    %104 = vmatpush1.msra.mxu0 0.0
    %105 = vmatprep.subr.mxu0 0.0
    %106 = vmatpush1.msra.mxu0 0.0
    %107 = vmatprep.subr.mxu0 0.0
    %108 = vmatpush1.msra.mxu0 0.0
    %109 = vmatprep.subr.mxu0 0.0
    %110 = vmatpush1.msra.mxu0 0.0
    %111 = vmatprep.subr.mxu0 0.0
    %112 = vmatpush1.msra.mxu0 0.0
    %113 = vmatprep.subr.mxu0 0.0
    %114 = vmatpush1.msra.mxu0 0.0
    %115 = vmatprep.subr.mxu0 0.0
    %116 = vmatpush1.msra.mxu0 0.0
    %117 = vmatprep.subr.mxu0 0.0
    %118 = vmatpush1.msra.mxu0 0.0
    %119 = vmatprep.subr.mxu0 0.0
    %120 = vmatpush1.msra.mxu0 0.0
    %121 = vmatprep.subr.mxu0 0.0
    %122 = vmatpush1.msra.mxu0 0.0
    %123 = vmatprep.subr.mxu0 0.0
    %124 = vmatpush1.msra.mxu0 0.0
    %125 = vmatprep.subr.mxu0 0.0
    %126 = vmatpush1.msra.mxu0 0.0
    %127 = vmatprep.subr.mxu0 0.0
    %128 = vmatpush1.msra.mxu0 0.0
    %129 = vmatprep.subr.mxu0 0.0
    %130 = vmatpush1.msra.mxu0 0.0
    %131 = vmatprep.subr.mxu0 0.0
    %132 = vmatpush1.msra.mxu0 0.0
    %133 = vmatprep.subr.mxu0 0.0
    %134 = vmatpush1.msra.mxu0 0.0
    %135 = vmatprep.subr.mxu0 0.0
    %136 = vmatpush1.msra.mxu0 0.0
    %137 = vmatprep.subr.mxu0 0.0
    %138 = vmatpush1.msra.mxu0 0.0
    %139 = vmatprep.subr.mxu0 0.0
    %140 = vmatpush1.msra.mxu0 0.0
    %141 = vmatprep.subr.mxu0 0.0
    %142 = vmatpush1.msra.mxu0 0.0
    %143 = vmatprep.subr.mxu0 0.0
    %144 = vmatpush1.msra.mxu0 0.0
    %145 = vmatprep.mubr.f32.mxu0 0.0
    %146 = vmatmul.mubr.f32.gmra.mrb[0].mxu0 %v34
    %v147 = vpop.f32.mrb[0].mxu0
    %v148 = vadd.f32 0.0, %v147
    %v149 = vpop.f32.mrb[0].mxu0
    %150 = vmatprep.mubr.f32.mxu0 0.0
    %151 = vmatmul.mubr.f32.gmra.mrb[0].mxu0 %v37
    %v152 = vpop.f32.mrb[0].mxu0
    %v153 = vadd.f32 0.0, %v152
    %v154 = vpop.f32.mrb[0].mxu0
    %155 = vmatprep.mubr.f32.mxu0 0.0
    %156 = vmatmul.mubr.f32.gmra.mrb[0].mxu0 %v40
    %v157 = vpop.f32.mrb[0].mxu0
    %v158 = vadd.f32 0.0, %v157
    %v159 = vpop.f32.mrb[0].mxu0
    %160 = vmatprep.mubr.f32.mxu0 0.0
    %161 = vmatmul.mubr.f32.gmra.mrb[0].mxu0 %v43
    %v162 = vpop.f32.mrb[0].mxu0
    %v163 = vadd.f32 0.0, %v162
    %v164 = vpop.f32.mrb[0].mxu0
    %165 = vmatprep.mubr.f32.mxu0 0.0
    %166 = vmatmul.mubr.f32.gmra.mrb[0].mxu0 %v46
    %v167 = vpop.f32.mrb[0].mxu0
    %v168 = vadd.f32 0.0, %v167
    %v169 = vpop.f32.mrb[0].mxu0
    %170 = vmatprep.mubr.f32.mxu0 0.0
    %171 = vmatmul.mubr.f32.gmra.mrb[0].mxu0 %v49
    %v172 = vpop.f32.mrb[0].mxu0
    %v173 = vadd.f32 0.0, %v172
    %v174 = vpop.f32.mrb[0].mxu0
    %175 = vmatprep.mubr.f32.mxu0 0.0
    %176 = vmatmul.mubr.f32.gmra.mrb[0].mxu0 %v52
    %v177 = vpop.f32.mrb[0].mxu0
    %v178 = vadd.f32 0.0, %v177
    %v179 = vpop.f32.mrb[0].mxu0
    %180 = vmatprep.mubr.f32.mxu0 0.0
    %181 = vmatmul.mubr.f32.gmra.mrb[0].mxu0 %v55
    %v182 = vpop.f32.mrb[0].mxu0
    %v183 = vadd.f32 0.0, %v182
    %v184 = vpop.f32.mrb[0].mxu0
    %185 = vmatprep.mubr.f32.mxu0 0.0
    %186 = vmatmul.mubr.f32.gmra.mrb[0].mxu0 %v58
    %v187 = vpop.f32.mrb[0].mxu0
    %v188 = vadd.f32 0.0, %v187
    %v189 = vpop.f32.mrb[0].mxu0
    %190 = vmatprep.mubr.f32.mxu0 0.0
    %191 = vmatmul.mubr.f32.gmra.mrb[0].mxu0 %v61
    %v192 = vpop.f32.mrb[0].mxu0
    %v193 = vadd.f32 0.0, %v192
    %v194 = vpop.f32.mrb[0].mxu0
    %195 = vmatprep.mubr.f32.mxu0 0.0
    %196 = vmatmul.mubr.f32.gmra.mrb[0].mxu0 %v64
    %v197 = vpop.f32.mrb[0].mxu0
    %v198 = vadd.f32 0.0, %v197
    %v199 = vpop.f32.mrb[0].mxu0
    %200 = vmatprep.mubr.f32.mxu0 0.0
    %201 = vmatmul.mubr.f32.gmra.mrb[0].mxu0 %v67
    %v202 = vpop.f32.mrb[0].mxu0
    %v203 = vadd.f32 0.0, %v202
    %v204 = vpop.f32.mrb[0].mxu0
    %205 = vmatprep.mubr.f32.mxu0 0.0
    %206 = vmatmul.mubr.f32.gmra.mrb[0].mxu0 %v70
    %v207 = vpop.f32.mrb[0].mxu0
    %v208 = vadd.f32 0.0, %v207
    %v209 = vpop.f32.mrb[0].mxu0
    %210 = vmatprep.mubr.f32.mxu0 0.0
    %211 = vmatmul.mubr.f32.gmra.mrb[0].mxu0 %v73
    %v212 = vpop.f32.mrb[0].mxu0
    %v213 = vadd.f32 0.0, %v212
    %v214 = vpop.f32.mrb[0].mxu0
    %215 = vmatprep.mubr.f32.mxu0 0.0
    %216 = vmatmul.mubr.f32.gmra.mrb[0].mxu0 %v76
    %v217 = vpop.f32.mrb[0].mxu0
    %v218 = vadd.f32 0.0, %v217
    %v219 = vpop.f32.mrb[0].mxu0
    %220 = vmatprep.mubr.f32.mxu0 0.0
    %221 = vmatmul.mubr.f32.gmra.mrb[0].mxu0 %v79
    %v222 = vpop.f32.mrb[0].mxu0
    %v223 = vadd.f32 0.0, %v222
    %v224 = vpop.f32.mrb[0].mxu0
    %225 = vdwg.mxu0
    %v226 = vpack.c.bf16 %v153, %v148
    %v227 = vpack.c.bf16 %v163, %v158
    %v228 = vpack.c.bf16 %v173, %v168
    %v229 = vpack.c.bf16 %v183, %v178
    %v230 = vpack.c.bf16 %v193, %v188
    %v231 = vpack.c.bf16 %v203, %v198
    %v232 = vpack.c.bf16 %v213, %v208
    %v233 = vpack.c.bf16 %v223, %v218
    %v242 = vunpack.c.l.b16 %v226
    %v243 = vunpack.c.h.b16 %v226
    %v244 = vunpack.c.l.b16 %v227
    %v245 = vunpack.c.h.b16 %v227
    %v246 = vunpack.c.l.b16 %v228
    %v247 = vunpack.c.h.b16 %v228
    %v248 = vunpack.c.l.b16 %v229
    %v249 = vunpack.c.h.b16 %v229
    %v250 = vunpack.c.l.b16 %v230
    %v251 = vunpack.c.h.b16 %v230
    %v252 = vunpack.c.l.b16 %v231
    %v253 = vunpack.c.h.b16 %v231
    %v254 = vunpack.c.l.b16 %v232
    %v255 = vunpack.c.h.b16 %v232
    %v256 = vunpack.c.l.b16 %v233
    %v257 = vunpack.c.h.b16 %v233
    %v258 = vpack.c.b16 %v242, %v242
    %v259 = vpack.c.b16 %v243, %v243
    %v260 = vpack.c.b16 %v244, %v244
    %v261 = vpack.c.b16 %v245, %v245
    %v262 = vpack.c.b16 %v246, %v246
    %v263 = vpack.c.b16 %v247, %v247
    %v264 = vpack.c.b16 %v248, %v248
    %v265 = vpack.c.b16 %v249, %v249
    %v266 = vpack.c.b16 %v250, %v250
    %v267 = vpack.c.b16 %v251, %v251
    %v268 = vpack.c.b16 %v252, %v252
    %v269 = vpack.c.b16 %v253, %v253
    %v270 = vpack.c.b16 %v254, %v254
    %v271 = vpack.c.b16 %v255, %v255
    %v272 = vpack.c.b16 %v256, %v256
    %v273 = vpack.c.b16 %v257, %v257
    %290 = vst [vmem:[#allocation2] sm:$0xf] %v258
    %291 = vst [vmem:[#allocation2 + $0x4] sm:$0xf] %v259
    %292 = vst [vmem:[#allocation2 + $0x8] sm:$0xf] %v260
    %293 = vst [vmem:[#allocation2 + $0xc] sm:$0xf] %v261
    %294 = vst [vmem:[#allocation2 + $0x10] sm:$0xf] %v262
    %295 = vst [vmem:[#allocation2 + $0x14] sm:$0xf] %v263
    %296 = vst [vmem:[#allocation2 + $0x18] sm:$0xf] %v264
    %297 = vst [vmem:[#allocation2 + $0x1c] sm:$0xf] %v265
    %298 = vst [vmem:[#allocation2 + $0x20] sm:$0xf] %v266
    %299 = vst [vmem:[#allocation2 + $0x24] sm:$0xf] %v267
    %300 = vst [vmem:[#allocation2 + $0x28] sm:$0xf] %v268
    %301 = vst [vmem:[#allocation2 + $0x2c] sm:$0xf] %v269
    %302 = vst [vmem:[#allocation2 + $0x30] sm:$0xf] %v270
    %303 = vst [vmem:[#allocation2 + $0x34] sm:$0xf] %v271
    %304 = vst [vmem:[#allocation2 + $0x38] sm:$0xf] %v272
    %305 = vst [vmem:[#allocation2 + $0x3c] sm:$0xf] %v273
    // Predicated region
    $region10: #{tpu_custom_call.1} parent=1 // pred_check
      _
    $region11: #{tpu_custom_call.1} parent=1 // pred_check_branch
      %307 = sbr.rel (0) target = $region13
    $region12: #{tpu_custom_call.1} parent=1 // pred_region
      %s309 = ssub.s32 1024, 1024
      %310 = vsyncadd [#allocation3], %s309
      %s311 = sshll.u32 [#allocation2], 4
      %s312 = int_to_ptr.vmem [resolvable:$true] %s311
      %317 = dma.vmem_to_hbm [thread:$0]  %s312, 1024, %s2, [#allocation3], 64, 64, 4
    $region13: #{tpu_custom_call.1} parent=1 // pred_fallthru
      _
    // Predicated region
    $region14: #{tpu_custom_call.1} parent=1 // pred_check
      _
    $region15: #{tpu_custom_call.1} parent=1 // pred_check_branch
      %319 = sbr.rel (0) target = $region17
    $region16: #{tpu_custom_call.1} parent=1 // pred_region
      %320 = dma.done [#allocation3], 1024
    $region17: #{tpu_custom_call.1} parent=1 // pred_fallthru
      _
    %321 = vsyncpa [#allocation3], 1

</llo_original>
